<compile_context>
chip_gen: v7x
topology: tpu7x:2x2x1
jax: 0.10.0
libtpu: 0.0.40
codegen_flags: <defaults>
</compile_context>

<pallas_src>
import jax
import jax.numpy as jnp
from jax.experimental import pallas as pl
from jax.experimental.pallas import tpu as pltpu


def _squeeze_copy_kernel(x_ref, o_ref):
    # Single-element copy on the scalar (SMEM) path.
    o_ref[0] = x_ref[0]


def squeeze_dim_unit_dim(a: jax.Array) -> jax.Array:
    """Equivalent of torch.squeeze(a, 0) for `a` with shape (1,).

    Dim 0 has size 1, so the result is a 0-D scalar holding the same value.
    The value moves through a minimal SMEM-only Pallas kernel (the required
    fusion anchor); the shape change itself is a free metadata reshape.
    """
    assert a.ndim == 1 and a.shape[0] == 1, a.shape

    # SMEM is a 32-bit scalar path: only route f32/i32 through the kernel.
    # Anything else (bf16/fp16/int8/...) gets the zero-work metadata reshape,
    # which is bit-exact and strictly cheaper anyway.
    if a.dtype not in (jnp.dtype(jnp.float32), jnp.dtype(jnp.int32)):
        return a.reshape(())

    out = pl.pallas_call(
        _squeeze_copy_kernel,
        out_shape=jax.ShapeDtypeStruct((1,), a.dtype),
        # Whole (1,)-element arrays live in SMEM: scalar loads/stores only,
        # no vector registers or masked vector stores involved.
        in_specs=[pl.BlockSpec(memory_space=pltpu.MemorySpace.SMEM)],
        out_specs=pl.BlockSpec(memory_space=pltpu.MemorySpace.SMEM),
        # Output aliases the input HBM buffer: no output allocation, no
        # 4-byte writeback DMA.
        input_output_aliases={0: 0},
        # Declare the (near-zero) true cost so XLA does not treat the opaque
        # custom call as heavyweight and create scheduling bubbles around it.
        cost_estimate=pl.CostEstimate(flops=0, transcendentals=0, bytes_accessed=8),
    )(a)

    # torch.squeeze(a, 0): dropping the size-1 leading dim is metadata-only.
    return out.reshape(())


if __name__ == "__main__":
    key = jax.random.PRNGKey(0)
    # Shape consistent with the annotation [1], float32.
    x = jax.random.normal(key, (1,), dtype=jnp.float32)

    y = squeeze_dim_unit_dim(x)
    jax.block_until_ready(y)

    # Reference: torch.squeeze(x, 0) -> 0-D scalar with the same value.
    assert y.shape == (), y.shape
    assert y.dtype == x.dtype
    assert bool(jnp.all(y == x[0]))

    print("KERNEL_OK")
</pallas_src>

<mosaic_0001>
module attributes {stable_mosaic.version = 11 : i64} {
  func.func @_squeeze_copy_kernel(%arg0: memref<1xf32, #tpu.memory_space<smem>>, %arg1: memref<1xf32, #tpu.memory_space<smem>>) attributes {dimension_semantics = [], scalar_prefetch = 0 : i64, scratch_operands = 0 : i64, tpu.core_type = #tpu.core_type<tc>} {
    %c0 = arith.constant 0 : index
    %0 = memref.load %arg0[%c0] : memref<1xf32, #tpu.memory_space<smem>>
    %c0_0 = arith.constant 0 : index
    %1 = memref.load %arg1[%c0_0] : memref<1xf32, #tpu.memory_space<smem>>
    memref.store %0, %arg1[%c0_0] : memref<1xf32, #tpu.memory_space<smem>>
    return
  }
}

</mosaic_0001>

<llo_original>
// kernel: tpu_custom_call.1
$region0: #{tpu_custom_call.1}
  #allocation0 [shape = 'u32[]', space=smem, size = 0x4, offset = 0x4, fixed_abs, tag = 'smem constant byte address 0x4 - core index']
  #allocation1 [shape = 'u32[144,128]{1,0:T(1,128)}', space=vmem, size = 0x12000, scoped, tag = 'internal scratch']
  #allocation2 [shape = 'f32[1]{0:T(128)S(6)}', space=smem, size = 0x200, scoped, tag = 'scoped memory for tpu_custom_call.1']
  %s0 = inlined_call_operand.<no memory space> [shape: f32[1], index: 0, kind: input, shape index: {}, may-alias: {0,1}]
  %s1 = inlined_call_operand.hbm [shape: f32[1], index: 1, kind: output, shape index: {}, may-alias: {0,1}]
  %s2 = sld [smem:[#allocation0]]
  $region14: #{tpu_custom_call.1} parent=0
    _
  %s4 = ssub.s32 1, %s2
  %s5 = scalar_select 0, %s4, %s2
  %6 = sst [smem:[#allocation2]] %s0
  $region1: #{tpu_custom_call.1} parent=0
    #allocation3 [shape = 'u8[512]{0}', space=smem, size = 0x200, scoped, tag = 'output window, operand 0, single buffered']
    #allocation4 [shape = 's32[1]{0}', space=sflag, size = 0x4, scoped, tag = 'scoped memory for tpu_custom_call.1']
    %7 = vsyncpa [#allocation4], 0
    // Predicated region
    $region2: #{tpu_custom_call.1} parent=1 // pred_check
      _
    $region3: #{tpu_custom_call.1} parent=1 // pred_check_branch
      %9 = sbr.rel (0) target = $region5
    $region4: #{tpu_custom_call.1} parent=1 // pred_region
      _
    $region5: #{tpu_custom_call.1} parent=1 // pred_fallthru
      _
    %s10 = sld [smem:[#allocation2]]
    %s11 = scalar_lea.smem [#allocation3], 0
    %12 = sst [smem:[%s11]] %s10
    // Predicated region
    $region6: #{tpu_custom_call.1} parent=1 // pred_check
      _
    $region7: #{tpu_custom_call.1} parent=1 // pred_check_branch
      %14 = sbr.rel (0) target = $region9
    $region8: #{tpu_custom_call.1} parent=1 // pred_region
      %s16 = ssub.s32 16, 16
      %17 = vsyncadd [#allocation4], %s16
      %20 = dma.smem_to_hbm [#allocation3], 16, %s1, [#allocation4]
    $region9: #{tpu_custom_call.1} parent=1 // pred_fallthru
      _
    // Predicated region
    $region10: #{tpu_custom_call.1} parent=1 // pred_check
      _
    $region11: #{tpu_custom_call.1} parent=1 // pred_check_branch
      %22 = sbr.rel (0) target = $region13
    $region12: #{tpu_custom_call.1} parent=1 // pred_region
      %23 = dma.done [#allocation4], 16
    $region13: #{tpu_custom_call.1} parent=1 // pred_fallthru
      _
    %24 = sfence
    %25 = vsyncpa [#allocation4], 1

</llo_original>
